<compile_context>
chip_gen: v7x
topology: tpu7x:2x2x1
jax: 0.10.0
libtpu: 0.0.40
codegen_flags: <defaults>
</compile_context>

<pallas_src>
import jax
import jax.numpy as jnp
from jax.experimental import pallas as pl
from jax.experimental.pallas import tpu as pltpu


def _round_up(n: int, m: int) -> int:
    return ((n + m - 1) // m) * m


def mlp_kernel(x_ref, w1_ref, b1_ref, w2_ref, b2_ref,
               w3_ref, b3_ref, w4_ref, b4_ref, o_ref):
    # x / weights are bf16 (MXU-native inputs); accumulate in f32, biases f32.
    # Layer 1: Linear(266 -> 128) + ReLU
    h = jnp.dot(x_ref[...], w1_ref[...],
                preferred_element_type=jnp.float32) + b1_ref[...]
    h = jnp.maximum(h, 0.0).astype(jnp.bfloat16)
    # Layer 2: Linear(128 -> 64) + ReLU
    h = jnp.dot(h, w2_ref[...],
                preferred_element_type=jnp.float32) + b2_ref[...]
    h = jnp.maximum(h, 0.0).astype(jnp.bfloat16)
    # Layer 3: Linear(64 -> 32) + ReLU
    h = jnp.dot(h, w3_ref[...],
                preferred_element_type=jnp.float32) + b3_ref[...]
    h = jnp.maximum(h, 0.0).astype(jnp.bfloat16)
    # Layer 4: Linear(32 -> 1)  (no activation)
    o_ref[...] = (jnp.dot(h, w4_ref[...],
                          preferred_element_type=jnp.float32)
                  + b4_ref[...]).astype(o_ref.dtype)


def mlp_forward(x, params, *, tb: int = 1024):
    """x: (B, 266) float32. params: (W1,b1,W2,b2,W3,b3,W4,b4), f32, W as (in,out)."""
    B, F = x.shape
    W1, b1, W2, b2, W3, b3, W4, b4 = params

    # bf16 inputs/weights: halves HBM traffic for the (bandwidth-bound) x
    # stream and matches the MXU's native input dtype on v5e/v6e/v7x.
    x_bf = x.astype(jnp.bfloat16)
    Ws = [w.astype(jnp.bfloat16) for w in (W1, W2, W3, W4)]
    bs = [b.astype(jnp.float32) for b in (b1, b2, b3, b4)]

    # Batch tile: multiple of 8 (sublane), capped at `tb`; pad B up to a
    # multiple of TB so every grid step sees a full tile (padded rows sliced
    # off afterwards).
    TB = min(tb, _round_up(B, 8))
    B_pad = _round_up(B, TB)
    if B_pad != B:
        x_bf = jnp.pad(x_bf, ((0, B_pad - B), (0, 0)))
    grid = (B_pad // TB,)

    # Weights/biases: full-array blocks with a constant index_map -> DMA'd into
    # VMEM once and kept resident across all batch tiles (~0.2 MiB total).
    def resident(a):
        return pl.BlockSpec(a.shape, lambda i: (0, 0))

    out = pl.pallas_call(
        mlp_kernel,
        out_shape=jax.ShapeDtypeStruct((B_pad, 1), jnp.float32),
        grid=grid,
        in_specs=[
            pl.BlockSpec((TB, F), lambda i: (i, 0)),   # x: streamed per tile
            resident(Ws[0]), resident(bs[0]),
            resident(Ws[1]), resident(bs[1]),
            resident(Ws[2]), resident(bs[2]),
            resident(Ws[3]), resident(bs[3]),
        ],
        out_specs=pl.BlockSpec((TB, 1), lambda i: (i, 0)),
        compiler_params=pltpu.CompilerParams(
            dimension_semantics=("parallel",),   # v7x: shard batch tiles over both TCs
        ),
    )(x_bf, Ws[0], bs[0], Ws[1], bs[1], Ws[2], bs[2], Ws[3], bs[3])
    return out[:B]


def init_params(key, input_len: int = 266):
    """Deterministic init mimicking PyTorch nn.Linear default
    (uniform(-1/sqrt(fan_in), 1/sqrt(fan_in))). Weights stored as (in, out)."""
    dims = [input_len, 128, 64, 32, 1]
    params = []
    for i in range(4):
        fan_in, fan_out = dims[i], dims[i + 1]
        key, kw, kb = jax.random.split(key, 3)
        bound = 1.0 / (fan_in ** 0.5)
        W = jax.random.uniform(kw, (fan_in, fan_out), jnp.float32,
                               minval=-bound, maxval=bound)
        b = jax.random.uniform(kb, (1, fan_out), jnp.float32,
                               minval=-bound, maxval=bound)
        params.extend([W, b])
    return tuple(params)


def mlp_reference_f32(x, params):
    """Plain f32 JAX reference (PyTorch-equivalent numerics)."""
    W1, b1, W2, b2, W3, b3, W4, b4 = params
    p = jax.lax.Precision.HIGHEST
    h = jnp.maximum(jnp.dot(x, W1, precision=p) + b1, 0.0)
    h = jnp.maximum(jnp.dot(h, W2, precision=p) + b2, 0.0)
    h = jnp.maximum(jnp.dot(h, W3, precision=p) + b3, 0.0)
    return jnp.dot(h, W4, precision=p) + b4


def mlp_reference_bf16(x, params):
    """Emulates the kernel's numerics: bf16 inputs/weights/activations,
    f32 accumulation — for a tight correctness check."""
    W1, b1, W2, b2, W3, b3, W4, b4 = params
    p = jax.lax.Precision.HIGHEST
    bf = lambda a: a.astype(jnp.bfloat16).astype(jnp.float32)
    h = jnp.maximum(jnp.dot(bf(x), bf(W1), precision=p) + b1, 0.0)
    h = jnp.maximum(jnp.dot(bf(h), bf(W2), precision=p) + b2, 0.0)
    h = jnp.maximum(jnp.dot(bf(h), bf(W3), precision=p) + b3, 0.0)
    return jnp.dot(bf(h), bf(W4), precision=p) + b4


if __name__ == "__main__":
    key = jax.random.PRNGKey(0)
    key, kx1, kx2 = jax.random.split(key, 3)

    INPUT_LEN = 266
    params = init_params(key, INPUT_LEN)

    # Small demo batch (single tile, block == full array).
    B1 = 8
    x1 = jax.random.normal(kx1, (B1, INPUT_LEN), dtype=jnp.float32)
    out1 = jax.block_until_ready(mlp_forward(x1, params))
    assert out1.shape == (B1, 1), out1.shape
    ref1_bf = mlp_reference_bf16(x1, params)
    ref1_f32 = mlp_reference_f32(x1, params)
    assert jnp.allclose(out1, ref1_bf, atol=5e-3, rtol=5e-3), "mismatch vs bf16-emulating reference"
    assert jnp.allclose(out1, ref1_f32, atol=1e-1, rtol=1e-1), "mismatch vs f32 reference"

    # Multi-tile path: B not divisible by TB, grid > 1, parallel batch axis.
    B2 = 300
    x2 = jax.random.normal(kx2, (B2, INPUT_LEN), dtype=jnp.float32)
    out2 = jax.block_until_ready(mlp_forward(x2, params, tb=128))
    assert out2.shape == (B2, 1), out2.shape
    ref2_bf = mlp_reference_bf16(x2, params)
    assert jnp.allclose(out2, ref2_bf, atol=5e-3, rtol=5e-3), "mismatch vs bf16-emulating reference (tiled)"

    print("KERNEL_OK")
</pallas_src>

<mosaic_0001>
module attributes {stable_mosaic.version = 11 : i64} {
  func.func @mlp_kernel(%arg0: i32, %arg1: memref<8x266xbf16, #tpu.memory_space<vmem>>, %arg2: memref<266x128xbf16, #tpu.memory_space<vmem>>, %arg3: memref<1x128xf32, #tpu.memory_space<vmem>>, %arg4: memref<128x64xbf16, #tpu.memory_space<vmem>>, %arg5: memref<1x64xf32, #tpu.memory_space<vmem>>, %arg6: memref<64x32xbf16, #tpu.memory_space<vmem>>, %arg7: memref<1x32xf32, #tpu.memory_space<vmem>>, %arg8: memref<32x1xbf16, #tpu.memory_space<vmem>>, %arg9: memref<1x1xf32, #tpu.memory_space<vmem>>, %arg10: memref<8x1xf32, #tpu.memory_space<vmem>>) attributes {dimension_semantics = [#tpu.dimension_semantics<parallel>], iteration_bounds = array<i64: 1>, scalar_prefetch = 0 : i64, scratch_operands = 0 : i64, tpu.core_type = #tpu.core_type<tc>, window_params = [{transform_indices = @transform_0, window_bounds = array<i64: 8, 266>}, {pipeline_mode = #tpu.pipeline_mode<synchronous>, transform_indices = @transform_1, window_bounds = array<i64: 266, 128>}, {pipeline_mode = #tpu.pipeline_mode<synchronous>, transform_indices = @transform_2, window_bounds = array<i64: 1, 128>}, {pipeline_mode = #tpu.pipeline_mode<synchronous>, transform_indices = @transform_3, window_bounds = array<i64: 128, 64>}, {pipeline_mode = #tpu.pipeline_mode<synchronous>, transform_indices = @transform_4, window_bounds = array<i64: 1, 64>}, {pipeline_mode = #tpu.pipeline_mode<synchronous>, transform_indices = @transform_5, window_bounds = array<i64: 64, 32>}, {pipeline_mode = #tpu.pipeline_mode<synchronous>, transform_indices = @transform_6, window_bounds = array<i64: 1, 32>}, {pipeline_mode = #tpu.pipeline_mode<synchronous>, transform_indices = @transform_7, window_bounds = array<i64: 32, 1>}, {pipeline_mode = #tpu.pipeline_mode<synchronous>, transform_indices = @transform_8, window_bounds = array<i64: 1, 1>}, {transform_indices = @transform_9, window_bounds = array<i64: 8, 1>}]} {
    %c0 = arith.constant 0 : index
    %c0_0 = arith.constant 0 : index
    %0 = vector.load %arg1[%c0, %c0_0] : memref<8x266xbf16, #tpu.memory_space<vmem>>, vector<8x266xbf16>
    %c0_1 = arith.constant 0 : index
    %c0_2 = arith.constant 0 : index
    %1 = vector.load %arg2[%c0_1, %c0_2] : memref<266x128xbf16, #tpu.memory_space<vmem>>, vector<266x128xbf16>
    %cst = arith.constant dense<0.000000e+00> : vector<8x128xf32>
    %2 = tpu.matmul %0, %1, %cst {dimension_numbers = #tpu.dot_dimension_numbers<[1], [0], [0], [1], [0, 0, 1, 1], [], []>} : vector<8x266xbf16>, vector<266x128xbf16>, vector<8x128xf32> -> vector<8x128xf32>
    %c0_3 = arith.constant 0 : index
    %c0_4 = arith.constant 0 : index
    %3 = vector.load %arg3[%c0_3, %c0_4] : memref<1x128xf32, #tpu.memory_space<vmem>>, vector<1x128xf32>
    %4 = vector.broadcast %3 : vector<1x128xf32> to vector<8x128xf32>
    %5 = arith.addf %2, %4 : vector<8x128xf32>
    %cst_5 = arith.constant 0.000000e+00 : f32
    %6 = vector.broadcast %cst_5 : f32 to vector<8x128xf32>
    %7 = arith.maximumf %5, %6 : vector<8x128xf32>
    %8 = arith.truncf %7 : vector<8x128xf32> to vector<8x128xbf16>
    %c0_6 = arith.constant 0 : index
    %c0_7 = arith.constant 0 : index
    %9 = vector.load %arg4[%c0_6, %c0_7] : memref<128x64xbf16, #tpu.memory_space<vmem>>, vector<128x64xbf16>
    %cst_8 = arith.constant dense<0.000000e+00> : vector<8x64xf32>
    %10 = tpu.matmul %8, %9, %cst_8 {dimension_numbers = #tpu.dot_dimension_numbers<[1], [0], [0], [1], [0, 0, 1, 1], [], []>} : vector<8x128xbf16>, vector<128x64xbf16>, vector<8x64xf32> -> vector<8x64xf32>
    %c0_9 = arith.constant 0 : index
    %c0_10 = arith.constant 0 : index
    %11 = vector.load %arg5[%c0_9, %c0_10] : memref<1x64xf32, #tpu.memory_space<vmem>>, vector<1x64xf32>
    %12 = vector.broadcast %11 : vector<1x64xf32> to vector<8x64xf32>
    %13 = arith.addf %10, %12 : vector<8x64xf32>
    %cst_11 = arith.constant 0.000000e+00 : f32
    %14 = vector.broadcast %cst_11 : f32 to vector<8x64xf32>
    %15 = arith.maximumf %13, %14 : vector<8x64xf32>
    %16 = arith.truncf %15 : vector<8x64xf32> to vector<8x64xbf16>
    %c0_12 = arith.constant 0 : index
    %c0_13 = arith.constant 0 : index
    %17 = vector.load %arg6[%c0_12, %c0_13] : memref<64x32xbf16, #tpu.memory_space<vmem>>, vector<64x32xbf16>
    %cst_14 = arith.constant dense<0.000000e+00> : vector<8x32xf32>
    %18 = tpu.matmul %16, %17, %cst_14 {dimension_numbers = #tpu.dot_dimension_numbers<[1], [0], [0], [1], [0, 0, 1, 1], [], []>} : vector<8x64xbf16>, vector<64x32xbf16>, vector<8x32xf32> -> vector<8x32xf32>
    %c0_15 = arith.constant 0 : index
    %c0_16 = arith.constant 0 : index
    %19 = vector.load %arg7[%c0_15, %c0_16] : memref<1x32xf32, #tpu.memory_space<vmem>>, vector<1x32xf32>
    %20 = vector.broadcast %19 : vector<1x32xf32> to vector<8x32xf32>
    %21 = arith.addf %18, %20 : vector<8x32xf32>
    %cst_17 = arith.constant 0.000000e+00 : f32
    %22 = vector.broadcast %cst_17 : f32 to vector<8x32xf32>
    %23 = arith.maximumf %21, %22 : vector<8x32xf32>
    %24 = arith.truncf %23 : vector<8x32xf32> to vector<8x32xbf16>
    %c0_18 = arith.constant 0 : index
    %c0_19 = arith.constant 0 : index
    %25 = vector.load %arg8[%c0_18, %c0_19] : memref<32x1xbf16, #tpu.memory_space<vmem>>, vector<32x1xbf16>
    %cst_20 = arith.constant dense<0.000000e+00> : vector<8x1xf32>
    %26 = tpu.matmul %24, %25, %cst_20 {dimension_numbers = #tpu.dot_dimension_numbers<[1], [0], [0], [1], [0, 0, 1, 1], [], []>} : vector<8x32xbf16>, vector<32x1xbf16>, vector<8x1xf32> -> vector<8x1xf32>
    %c0_21 = arith.constant 0 : index
    %c0_22 = arith.constant 0 : index
    %27 = vector.load %arg9[%c0_21, %c0_22] : memref<1x1xf32, #tpu.memory_space<vmem>>, vector<1x1xf32>
    %28 = vector.broadcast %27 : vector<1x1xf32> to vector<8x1xf32>
    %29 = arith.addf %26, %28 : vector<8x1xf32>
    %c0_23 = arith.constant 0 : index
    %c0_24 = arith.constant 0 : index
    %30 = vector.load %arg10[%c0_23, %c0_24] : memref<8x1xf32, #tpu.memory_space<vmem>>, vector<8x1xf32>
    tpu.vector_store %arg10[%c0_23, %c0_24], %29 {strides = array<i32>} : memref<8x1xf32, #tpu.memory_space<vmem>>, vector<8x1xf32>,
    return
  }
  func.func @transform_0(%arg0: i32) -> (i32, i32) {
    %c0_i32 = arith.constant 0 : i32
    %c0_i32_0 = arith.constant 0 : i32
    return %arg0, %c0_i32 : i32, i32
  }
  func.func @transform_1(%arg0: i32) -> (i32, i32) {
    %c0_i32 = arith.constant 0 : i32
    %c0_i32_0 = arith.constant 0 : i32
    %c0_i32_1 = arith.constant 0 : i32
    return %c0_i32, %c0_i32_0 : i32, i32
  }
  func.func @transform_2(%arg0: i32) -> (i32, i32) {
    %c0_i32 = arith.constant 0 : i32
    %c0_i32_0 = arith.constant 0 : i32
    %c0_i32_1 = arith.constant 0 : i32
    return %c0_i32, %c0_i32_0 : i32, i32
  }
  func.func @transform_3(%arg0: i32) -> (i32, i32) {
    %c0_i32 = arith.constant 0 : i32
    %c0_i32_0 = arith.constant 0 : i32
    %c0_i32_1 = arith.constant 0 : i32
    return %c0_i32, %c0_i32_0 : i32, i32
  }
  func.func @transform_4(%arg0: i32) -> (i32, i32) {
    %c0_i32 = arith.constant 0 : i32
    %c0_i32_0 = arith.constant 0 : i32
    %c0_i32_1 = arith.constant 0 : i32
    return %c0_i32, %c0_i32_0 : i32, i32
  }
  func.func @transform_5(%arg0: i32) -> (i32, i32) {
    %c0_i32 = arith.constant 0 : i32
    %c0_i32_0 = arith.constant 0 : i32
    %c0_i32_1 = arith.constant 0 : i32
    return %c0_i32, %c0_i32_0 : i32, i32
  }
  func.func @transform_6(%arg0: i32) -> (i32, i32) {
    %c0_i32 = arith.constant 0 : i32
    %c0_i32_0 = arith.constant 0 : i32
    %c0_i32_1 = arith.constant 0 : i32
    return %c0_i32, %c0_i32_0 : i32, i32
  }
  func.func @transform_7(%arg0: i32) -> (i32, i32) {
    %c0_i32 = arith.constant 0 : i32
    %c0_i32_0 = arith.constant 0 : i32
    %c0_i32_1 = arith.constant 0 : i32
    return %c0_i32, %c0_i32_0 : i32, i32
  }
  func.func @transform_8(%arg0: i32) -> (i32, i32) {
    %c0_i32 = arith.constant 0 : i32
    %c0_i32_0 = arith.constant 0 : i32
    %c0_i32_1 = arith.constant 0 : i32
    return %c0_i32, %c0_i32_0 : i32, i32
  }
  func.func @transform_9(%arg0: i32) -> (i32, i32) {
    %c0_i32 = arith.constant 0 : i32
    %c0_i32_0 = arith.constant 0 : i32
    return %arg0, %c0_i32 : i32, i32
  }
}

</mosaic_0001>

<llo_original>
// kernel: tpu_custom_call.1
$region0: #{tpu_custom_call.1}
  #allocation0 [shape = 'u32[]', space=smem, size = 0x4, offset = 0x4, fixed_abs, tag = 'smem constant byte address 0x4 - core index']
  #allocation1 [shape = 'u32[144,128]{1,0:T(1,128)}', space=vmem, size = 0x12000, scoped, tag = 'internal scratch']
  #allocation2 [shape = 'f32[1,1]{1,0:T(1,128)S(1)}', space=vmem, size = 0x200, scoped, tag = 'scoped memory for tpu_custom_call.1']
  %s0 = inlined_call_operand.hbm [shape: bf16[8,266], index: 0, kind: input, shape index: {}]
  %s1 = inlined_call_operand.vmem [shape: bf16[266,128], index: 1, kind: input, shape index: {}]
  %s2 = inlined_call_operand.vmem [shape: f32[1,128], index: 2, kind: input, shape index: {}]
  %s3 = inlined_call_operand.vmem [shape: bf16[128,64], index: 3, kind: input, shape index: {}]
  %s4 = inlined_call_operand.vmem [shape: f32[1,64], index: 4, kind: input, shape index: {}]
  %s5 = inlined_call_operand.vmem [shape: bf16[64,32], index: 5, kind: input, shape index: {}]
  %s6 = inlined_call_operand.vmem [shape: f32[1,32], index: 6, kind: input, shape index: {}]
  %s7 = inlined_call_operand.vmem [shape: bf16[32,1], index: 7, kind: input, shape index: {}]
  %s8 = inlined_call_operand.<no memory space> [shape: f32[1,1], index: 8, kind: input, shape index: {}]
  %s9 = inlined_call_operand.vmem [shape: f32[8,1], index: 9, kind: output, shape index: {}]
  %s10 = sld [smem:[#allocation0]]
  $region50: #{tpu_custom_call.1} parent=0
    _
  %s12 = ssub.s32 1, %s10
  %s13 = scalar_select 0, %s12, %s10
  %v14 = vstv %s8
  %15 = vst [vmem:[#allocation2] sm:$0x1] %v14
  $region1: #{tpu_custom_call.1} parent=0
    #allocation3 [shape = 'u8[6144]{0}', space=vmem, size = 0x1800, scoped, tag = 'input window, operand 0, single buffered']
    #allocation4 [shape = 's32[1]{0}', space=sflag, size = 0x4, scoped, tag = 'scoped memory for tpu_custom_call.1']
    %16 = vsyncpa [#allocation4], 0
    // Predicated region
    $region2: #{tpu_custom_call.1} parent=1 // pred_check
      _
    $region3: #{tpu_custom_call.1} parent=1 // pred_check_branch
      %18 = sbr.rel (0) target = $region5
    $region4: #{tpu_custom_call.1} parent=1 // pred_region
      %s20 = ssub.s32 192, 192
      %21 = vsyncadd [#allocation4], %s20
      %s23 = sshll.u32 [#allocation3], 4
      %s24 = int_to_ptr.vmem [resolvable:$true] %s23
      %26 = dma.hbm_to_vmem [thread:$0]  %s0, 192, %s24, [#allocation4]
    $region5: #{tpu_custom_call.1} parent=1 // pred_fallthru
      _
    // Predicated region
    $region6: #{tpu_custom_call.1} parent=1 // pred_check
      _
    $region7: #{tpu_custom_call.1} parent=1 // pred_check_branch
      %28 = sbr.rel (0) target = $region9
    $region8: #{tpu_custom_call.1} parent=1 // pred_region
      _
    $region9: #{tpu_custom_call.1} parent=1 // pred_fallthru
      _
    // Predicated region
    $region10: #{tpu_custom_call.1} parent=1 // pred_check
      _
    $region11: #{tpu_custom_call.1} parent=1 // pred_check_branch
      %30 = sbr.rel (0) target = $region13
    $region12: #{tpu_custom_call.1} parent=1 // pred_region
      _
    $region13: #{tpu_custom_call.1} parent=1 // pred_fallthru
      _
    // Predicated region
    $region14: #{tpu_custom_call.1} parent=1 // pred_check
      _
    $region15: #{tpu_custom_call.1} parent=1 // pred_check_branch
      %32 = sbr.rel (0) target = $region17
    $region16: #{tpu_custom_call.1} parent=1 // pred_region
      _
    $region17: #{tpu_custom_call.1} parent=1 // pred_fallthru
      _
    // Predicated region
    $region18: #{tpu_custom_call.1} parent=1 // pred_check
      _
    $region19: #{tpu_custom_call.1} parent=1 // pred_check_branch
      %34 = sbr.rel (0) target = $region21
    $region20: #{tpu_custom_call.1} parent=1 // pred_region
      _
    $region21: #{tpu_custom_call.1} parent=1 // pred_fallthru
      _
    // Predicated region
    $region22: #{tpu_custom_call.1} parent=1 // pred_check
      _
    $region23: #{tpu_custom_call.1} parent=1 // pred_check_branch
      %36 = sbr.rel (0) target = $region25
    $region24: #{tpu_custom_call.1} parent=1 // pred_region
      _
    $region25: #{tpu_custom_call.1} parent=1 // pred_fallthru
      _
    // Predicated region
    $region26: #{tpu_custom_call.1} parent=1 // pred_check
      _
    $region27: #{tpu_custom_call.1} parent=1 // pred_check_branch
      %38 = sbr.rel (0) target = $region29
    $region28: #{tpu_custom_call.1} parent=1 // pred_region
      _
    $region29: #{tpu_custom_call.1} parent=1 // pred_fallthru
      _
    // Predicated region
    $region30: #{tpu_custom_call.1} parent=1 // pred_check
      _
    $region31: #{tpu_custom_call.1} parent=1 // pred_check_branch
      %40 = sbr.rel (0) target = $region33
    $region32: #{tpu_custom_call.1} parent=1 // pred_region
      _
    $region33: #{tpu_custom_call.1} parent=1 // pred_fallthru
      _
    // Predicated region
    $region34: #{tpu_custom_call.1} parent=1 // pred_check
      _
    $region35: #{tpu_custom_call.1} parent=1 // pred_check_branch
      %42 = sbr.rel (0) target = $region37
    $region36: #{tpu_custom_call.1} parent=1 // pred_region
      _
    $region37: #{tpu_custom_call.1} parent=1 // pred_fallthru
      _
    // Predicated region
    $region38: #{tpu_custom_call.1} parent=1 // pred_check
      _
    $region39: #{tpu_custom_call.1} parent=1 // pred_check_branch
      %44 = sbr.rel (0) target = $region41
    $region40: #{tpu_custom_call.1} parent=1 // pred_region
      %45 = dma.done [#allocation4], 192
    $region41: #{tpu_custom_call.1} parent=1 // pred_fallthru
      _
    %v47 = vld [vmem:[#allocation3] sm:$0xff]
    %v48 = vld [vmem:[#allocation3 + $0x8] sm:$0xf]
    %v49 = vld [vmem:[%s1] sm:$0xf]
    %v50 = vld [vmem:[%s1 + $0x4] sm:$0xf]
    %v51 = vld [vmem:[%s1 + $0x8] sm:$0xf]
    %v52 = vld [vmem:[%s1 + $0xc] sm:$0xf]
    %v53 = vld [vmem:[%s1 + $0x10] sm:$0xf]
    %v54 = vld [vmem:[%s1 + $0x14] sm:$0xf]
    %v55 = vld [vmem:[%s1 + $0x18] sm:$0xf]
    %v56 = vld [vmem:[%s1 + $0x1c] sm:$0xf]
    %v57 = vld [vmem:[%s1 + $0x20] sm:$0xf]
    %v58 = vld [vmem:[%s1 + $0x24] sm:$0xf]
    %v59 = vld [vmem:[%s1 + $0x28] sm:$0xf]
    %v60 = vld [vmem:[%s1 + $0x2c] sm:$0xf]
    %v61 = vld [vmem:[%s1 + $0x30] sm:$0xf]
    %v62 = vld [vmem:[%s1 + $0x34] sm:$0xf]
    %v63 = vld [vmem:[%s1 + $0x38] sm:$0xf]
    %v64 = vld [vmem:[%s1 + $0x3c] sm:$0xf]
    %v65 = vld [vmem:[%s1 + $0x40] sm:$0xf]
    %v66 = vld [vmem:[%s1 + $0x44] sm:$0xf]
    %v67 = vld [vmem:[%s1 + $0x48] sm:$0xf]
    %v68 = vld [vmem:[%s1 + $0x4c] sm:$0xf]
    %v69 = vld [vmem:[%s1 + $0x50] sm:$0xf]
    %v70 = vld [vmem:[%s1 + $0x54] sm:$0xf]
    %v71 = vld [vmem:[%s1 + $0x58] sm:$0xf]
    %v72 = vld [vmem:[%s1 + $0x5c] sm:$0xf]
    %v73 = vld [vmem:[%s1 + $0x60] sm:$0xf]
    %v74 = vld [vmem:[%s1 + $0x64] sm:$0xf]
    %v75 = vld [vmem:[%s1 + $0x68] sm:$0xf]
    %v76 = vld [vmem:[%s1 + $0x6c] sm:$0xf]
    %v77 = vld [vmem:[%s1 + $0x70] sm:$0xf]
    %v78 = vld [vmem:[%s1 + $0x74] sm:$0xf]
    %v79 = vld [vmem:[%s1 + $0x78] sm:$0xf]
    %v80 = vld [vmem:[%s1 + $0x7c] sm:$0xf]
    %v81 = vld [vmem:[%s1 + $0x80] sm:$0xf]
    %v82 = vld [vmem:[%s1 + $0x84] sm:$0x1]
    %v83 = vld [vmem:[%s2] sm:$0x1]
    %v85 = vlaneseq
    %v86 = vshrl.u32 %v85, 7
    %v87 = vsub.s32 0, %v86
    %v88 = vrot.slane %v83, %v87
    %v92 = vunpack.c.l.b16 %v47
    %v93 = vunpack.c.h.b16 %v47
    %v94 = vunpack.c.l.b16 %v48
    %v95 = vpack.c.b16 %v92, %v92
    %v96 = vpack.c.b16 %v93, %v93
    %v97 = vpack.c.b16 %v94, %v94
    %v134 = vunpack.c.l.b16 %v49
    %v135 = vunpack.c.l.b16 %v50
    %v136 = vunpack.c.l.b16 %v51
    %v137 = vunpack.c.l.b16 %v52
    %v138 = vunpack.c.l.b16 %v53
    %v139 = vunpack.c.l.b16 %v54
    %v140 = vunpack.c.l.b16 %v55
    %v141 = vunpack.c.l.b16 %v56
    %v142 = vunpack.c.l.b16 %v57
    %v143 = vunpack.c.l.b16 %v58
    %v144 = vunpack.c.l.b16 %v59
    %v145 = vunpack.c.l.b16 %v60
    %v146 = vunpack.c.l.b16 %v61
    %v147 = vunpack.c.l.b16 %v62
    %v148 = vunpack.c.l.b16 %v63
    %v149 = vunpack.c.l.b16 %v64
    %v150 = vunpack.c.l.b16 %v65
    %v151 = vunpack.c.l.b16 %v66
    %v152 = vunpack.c.l.b16 %v67
    %v153 = vunpack.c.l.b16 %v68
    %v154 = vunpack.c.l.b16 %v69
    %v155 = vunpack.c.l.b16 %v70
    %v156 = vunpack.c.l.b16 %v71
    %v157 = vunpack.c.l.b16 %v72
    %v158 = vunpack.c.l.b16 %v73
    %v159 = vunpack.c.l.b16 %v74
    %v160 = vunpack.c.l.b16 %v75
    %v161 = vunpack.c.l.b16 %v76
    %v162 = vunpack.c.l.b16 %v77
    %v163 = vunpack.c.l.b16 %v78
    %v164 = vunpack.c.l.b16 %v79
    %v165 = vunpack.c.l.b16 %v80
    %v166 = vunpack.c.l.b16 %v81
    %v167 = vunpack.c.l.b16 %v82
    %v168 = vpack.c.b16 %v135, %v134
    %v169 = vpack.c.b16 %v137, %v136
    %v170 = vpack.c.b16 %v139, %v138
    %v171 = vpack.c.b16 %v141, %v140
    %v172 = vpack.c.b16 %v143, %v142
    %v173 = vpack.c.b16 %v145, %v144
    %v174 = vpack.c.b16 %v147, %v146
    %v175 = vpack.c.b16 %v149, %v148
    %v176 = vpack.c.b16 %v151, %v150
    %v177 = vpack.c.b16 %v153, %v152
    %v178 = vpack.c.b16 %v155, %v154
    %v179 = vpack.c.b16 %v157, %v156
    %v180 = vpack.c.b16 %v159, %v158
    %v181 = vpack.c.b16 %v161, %v160
    %v182 = vpack.c.b16 %v163, %v162
    %v183 = vpack.c.b16 %v165, %v164
    %v184 = vpack.c.b16 %v167, %v166
    %vm201 = vcmask 80896
    %v203 = vsel %vm201, %v97, 0
    %vm205 = vcmask 1044480
    %v207 = vsel %vm205, %v184, 0
    %209 = vmatprep.subr.bf16.mxu0 0
    %210 = vmatpush1.bf16.msra.mxu0 %v168
    %211 = vmatprep.subr.bf16.mxu0 0
    %212 = vmatpush1.bf16.msra.mxu0 %v169
    %213 = vmatprep.subr.bf16.mxu0 0
    %214 = vmatpush1.bf16.msra.mxu0 %v170
    %215 = vmatprep.subr.bf16.mxu0 0
    %216 = vmatpush1.bf16.msra.mxu0 %v171
    %217 = vmatprep.subr.bf16.mxu0 0
    %218 = vmatpush1.bf16.msra.mxu0 %v172
    %219 = vmatprep.subr.bf16.mxu0 0
    %220 = vmatpush1.bf16.msra.mxu0 %v173
    %221 = vmatprep.subr.bf16.mxu0 0
    %222 = vmatpush1.bf16.msra.mxu0 %v174
    %223 = vmatprep.subr.bf16.mxu0 0
    %224 = vmatpush1.bf16.msra.mxu0 %v175
    %225 = vmatprep.subr.bf16.mxu0 0
    %226 = vmatpush1.bf16.msra.mxu0 %v176
    %227 = vmatprep.subr.bf16.mxu0 0
    %228 = vmatpush1.bf16.msra.mxu0 %v177
    %229 = vmatprep.subr.bf16.mxu0 0
    %230 = vmatpush1.bf16.msra.mxu0 %v178
    %231 = vmatprep.subr.bf16.mxu0 0
    %232 = vmatpush1.bf16.msra.mxu0 %v179
    %233 = vmatprep.subr.bf16.mxu0 0
    %234 = vmatpush1.bf16.msra.mxu0 %v180
    %235 = vmatprep.subr.bf16.mxu0 0
    %236 = vmatpush1.bf16.msra.mxu0 %v181
    %237 = vmatprep.subr.bf16.mxu0 0
    %238 = vmatpush1.bf16.msra.mxu0 %v182
    %239 = vmatprep.subr.bf16.mxu0 0
    %240 = vmatpush1.bf16.msra.mxu0 %v183
    %241 = vmatprep.mubr.bf16.mxu0 %v96
    %242 = vmatmul.mubr.bf16.gmra.mrb[0].mxu0 %v95
    %v243 = vpop.f32.mrb[0].mxu0
    %v244 = vadd.f32 %v88, %v243
    %v245 = vpop.f32.mrb[0].mxu0
    %v246 = vpop.f32.mrb[0].mxu0
    %v247 = vpop.f32.mrb[0].mxu0
    %248 = vdwg.mxu0
    %249 = vmatprep.subr.bf16.mxu0 0
    %250 = vmatpush1.bf16.msra.mxu0 %v207
    %251 = vmatprep.subr.bf16.mxu0 0
    %252 = vmatpush1.bf16.msra.mxu0 0
    %253 = vmatprep.subr.bf16.mxu0 0
    %254 = vmatpush1.bf16.msra.mxu0 0
    %255 = vmatprep.subr.bf16.mxu0 0
    %256 = vmatpush1.bf16.msra.mxu0 0
    %257 = vmatprep.subr.bf16.mxu0 0
    %258 = vmatpush1.bf16.msra.mxu0 0
    %259 = vmatprep.subr.bf16.mxu0 0
    %260 = vmatpush1.bf16.msra.mxu0 0
    %261 = vmatprep.subr.bf16.mxu0 0
    %262 = vmatpush1.bf16.msra.mxu0 0
    %263 = vmatprep.subr.bf16.mxu0 0
    %264 = vmatpush1.bf16.msra.mxu0 0
    %265 = vmatprep.subr.bf16.mxu0 0
    %266 = vmatpush1.bf16.msra.mxu0 0
    %267 = vmatprep.subr.bf16.mxu0 0
    %268 = vmatpush1.bf16.msra.mxu0 0
    %269 = vmatprep.subr.bf16.mxu0 0
    %270 = vmatpush1.bf16.msra.mxu0 0
    %271 = vmatprep.subr.bf16.mxu0 0
    %272 = vmatpush1.bf16.msra.mxu0 0
    %273 = vmatprep.subr.bf16.mxu0 0
    %274 = vmatpush1.bf16.msra.mxu0 0
    %275 = vmatprep.subr.bf16.mxu0 0
    %276 = vmatpush1.bf16.msra.mxu0 0
    %277 = vmatprep.subr.bf16.mxu0 0
    %278 = vmatpush1.bf16.msra.mxu0 0
    %279 = vmatprep.subr.bf16.mxu0 0
    %280 = vmatpush1.bf16.msra.mxu0 0
    %281 = vmatprep.mubr.bf16.mxu0 0
    %282 = vmatmul.mubr.bf16.gmra.mrb[0].mxu0 %v203
    %v283 = vpop.f32.mrb[0].mxu0
    %v284 = vadd.f32 %v244, %v283
    %v285 = vpop.f32.mrb[0].mxu0
    %v286 = vpop.f32.mrb[0].mxu0
    %v287 = vpop.f32.mrb[0].mxu0
    %288 = vdwg.mxu0
    %v289 = vmax.f32 %v284, 0.0
    %v290 = vpack.c.bf16 %v289, %v289
    %v291 = vld [vmem:[%s3] sm:$0xf]
    %v292 = vld [vmem:[%s3 + $0x4] sm:$0xf]
    %v293 = vld [vmem:[%s3 + $0x8] sm:$0xf]
    %v294 = vld [vmem:[%s3 + $0xc] sm:$0xf]
    %v295 = vld [vmem:[%s3 + $0x10] sm:$0xf]
    %v296 = vld [vmem:[%s3 + $0x14] sm:$0xf]
    %v297 = vld [vmem:[%s3 + $0x18] sm:$0xf]
    %v298 = vld [vmem:[%s3 + $0x1c] sm:$0xf]
    %v299 = vld [vmem:[%s3 + $0x20] sm:$0xf]
    %v300 = vld [vmem:[%s3 + $0x24] sm:$0xf]
    %v301 = vld [vmem:[%s3 + $0x28] sm:$0xf]
    %v302 = vld [vmem:[%s3 + $0x2c] sm:$0xf]
    %v303 = vld [vmem:[%s3 + $0x30] sm:$0xf]
    %v304 = vld [vmem:[%s3 + $0x34] sm:$0xf]
    %v305 = vld [vmem:[%s3 + $0x38] sm:$0xf]
    %v306 = vld [vmem:[%s3 + $0x3c] sm:$0xf]
    %v307 = vld [vmem:[%s4] sm:$0x1]
    %v309 = vlaneseq
    %v310 = vshrl.u32 %v309, 7
    %v311 = vsub.s32 0, %v310
    %v312 = vrot.slane %v307, %v311
    %v330 = vunpack.c.l.b16 %v291
    %v331 = vunpack.c.l.b16 %v292
    %v332 = vunpack.c.l.b16 %v293
    %v333 = vunpack.c.l.b16 %v294
    %v334 = vunpack.c.l.b16 %v295
    %v335 = vunpack.c.l.b16 %v296
    %v336 = vunpack.c.l.b16 %v297
    %v337 = vunpack.c.l.b16 %v298
    %v338 = vunpack.c.l.b16 %v299
    %v339 = vunpack.c.l.b16 %v300
    %v340 = vunpack.c.l.b16 %v301
    %v341 = vunpack.c.l.b16 %v302
    %v342 = vunpack.c.l.b16 %v303
    %v343 = vunpack.c.l.b16 %v304
    %v344 = vunpack.c.l.b16 %v305
    %v345 = vunpack.c.l.b16 %v306
    %v346 = vpack.c.b16 %v331, %v330
    %v347 = vpack.c.b16 %v333, %v332
    %v348 = vpack.c.b16 %v335, %v334
    %v349 = vpack.c.b16 %v337, %v336
    %v350 = vpack.c.b16 %v339, %v338
    %v351 = vpack.c.b16 %v341, %v340
    %v352 = vpack.c.b16 %v343, %v342
    %v353 = vpack.c.b16 %v345, %v344
    %362 = vmatprep.subr.bf16.mxu0 0
    %363 = vmatpush1.bf16.msra.mxu0 %v346
    %364 = vmatprep.subr.bf16.mxu0 0
    %365 = vmatpush1.bf16.msra.mxu0 %v347
    %366 = vmatprep.subr.bf16.mxu0 0
    %367 = vmatpush1.bf16.msra.mxu0 %v348
    %368 = vmatprep.subr.bf16.mxu0 0
    %369 = vmatpush1.bf16.msra.mxu0 %v349
    %370 = vmatprep.subr.bf16.mxu0 0
    %371 = vmatpush1.bf16.msra.mxu0 %v350
    %372 = vmatprep.subr.bf16.mxu0 0
    %373 = vmatpush1.bf16.msra.mxu0 %v351
    %374 = vmatprep.subr.bf16.mxu0 0
    %375 = vmatpush1.bf16.msra.mxu0 %v352
    %376 = vmatprep.subr.bf16.mxu0 0
    %377 = vmatpush1.bf16.msra.mxu0 %v353
    %378 = vmatprep.subr.bf16.mxu0 0
    %379 = vmatpush1.bf16.msra.mxu0 0
    %380 = vmatprep.subr.bf16.mxu0 0
    %381 = vmatpush1.bf16.msra.mxu0 0
    %382 = vmatprep.subr.bf16.mxu0 0
    %383 = vmatpush1.bf16.msra.mxu0 0
    %384 = vmatprep.subr.bf16.mxu0 0
    %385 = vmatpush1.bf16.msra.mxu0 0
    %386 = vmatprep.subr.bf16.mxu0 0
    %387 = vmatpush1.bf16.msra.mxu0 0
    %388 = vmatprep.subr.bf16.mxu0 0
    %389 = vmatpush1.bf16.msra.mxu0 0
    %390 = vmatprep.subr.bf16.mxu0 0
    %391 = vmatpush1.bf16.msra.mxu0 0
    %392 = vmatprep.subr.bf16.mxu0 0
    %393 = vmatpush1.bf16.msra.mxu0 0
    %394 = vmatprep.mubr.bf16.mxu0 0
    %395 = vmatmul.mubr.bf16.gmra.mrb[0].mxu0 %v290
    %v396 = vpop.f32.mrb[0].mxu0
    %v397 = vadd.f32 %v312, %v396
    %v398 = vpop.f32.mrb[0].mxu0
    %v399 = vpop.f32.mrb[0].mxu0
    %v400 = vpop.f32.mrb[0].mxu0
    %401 = vdwg.mxu0
    %v402 = vmax.f32 %v397, 0.0
    %v403 = vpack.c.bf16 %v402, %v402
    %v404 = vld [vmem:[%s5] sm:$0xf]
    %v405 = vld [vmem:[%s5 + $0x4] sm:$0xf]
    %v406 = vld [vmem:[%s5 + $0x8] sm:$0xf]
    %v407 = vld [vmem:[%s5 + $0xc] sm:$0xf]
    %v408 = vld [vmem:[%s5 + $0x10] sm:$0xf]
    %v409 = vld [vmem:[%s5 + $0x14] sm:$0xf]
    %v410 = vld [vmem:[%s5 + $0x18] sm:$0xf]
    %v411 = vld [vmem:[%s5 + $0x1c] sm:$0xf]
    %v412 = vld [vmem:[%s6] sm:$0x1]
    %v414 = vlaneseq
    %v415 = vshrl.u32 %v414, 7
    %v416 = vsub.s32 0, %v415
    %v417 = vrot.slane %v412, %v416
    %v427 = vunpack.c.l.b16 %v404
    %v428 = vunpack.c.l.b16 %v405
    %v429 = vunpack.c.l.b16 %v406
    %v430 = vunpack.c.l.b16 %v407
    %v431 = vunpack.c.l.b16 %v408
    %v432 = vunpack.c.l.b16 %v409
    %v433 = vunpack.c.l.b16 %v410
    %v434 = vunpack.c.l.b16 %v411
    %v435 = vpack.c.b16 %v428, %v427
    %v436 = vpack.c.b16 %v430, %v429
    %v437 = vpack.c.b16 %v432, %v431
    %v438 = vpack.c.b16 %v434, %v433
    %vm443 = vcmask 523264
    %v445 = vsel %vm443, %v403, 0
    %447 = vmatprep.subr.bf16.mxu0 0
    %448 = vmatpush1.bf16.msra.mxu0 %v435
    %449 = vmatprep.subr.bf16.mxu0 0
    %450 = vmatpush1.bf16.msra.mxu0 %v436
    %451 = vmatprep.subr.bf16.mxu0 0
    %452 = vmatpush1.bf16.msra.mxu0 %v437
    %453 = vmatprep.subr.bf16.mxu0 0
    %454 = vmatpush1.bf16.msra.mxu0 %v438
    %455 = vmatprep.subr.bf16.mxu0 0
    %456 = vmatpush1.bf16.msra.mxu0 0
    %457 = vmatprep.subr.bf16.mxu0 0
    %458 = vmatpush1.bf16.msra.mxu0 0
    %459 = vmatprep.subr.bf16.mxu0 0
    %460 = vmatpush1.bf16.msra.mxu0 0
    %461 = vmatprep.subr.bf16.mxu0 0
    %462 = vmatpush1.bf16.msra.mxu0 0
    %463 = vmatprep.subr.bf16.mxu0 0
    %464 = vmatpush1.bf16.msra.mxu0 0
    %465 = vmatprep.subr.bf16.mxu0 0
    %466 = vmatpush1.bf16.msra.mxu0 0
    %467 = vmatprep.subr.bf16.mxu0 0
    %468 = vmatpush1.bf16.msra.mxu0 0
    %469 = vmatprep.subr.bf16.mxu0 0
    %470 = vmatpush1.bf16.msra.mxu0 0
    %471 = vmatprep.subr.bf16.mxu0 0
    %472 = vmatpush1.bf16.msra.mxu0 0
    %473 = vmatprep.subr.bf16.mxu0 0
    %474 = vmatpush1.bf16.msra.mxu0 0
    %475 = vmatprep.subr.bf16.mxu0 0
    %476 = vmatpush1.bf16.msra.mxu0 0
    %477 = vmatprep.subr.bf16.mxu0 0
    %478 = vmatpush1.bf16.msra.mxu0 0
    %479 = vmatprep.mubr.bf16.mxu0 0
    %480 = vmatmul.mubr.bf16.gmra.mrb[0].mxu0 %v445
    %v481 = vpop.f32.mrb[0].mxu0
    %v482 = vadd.f32 %v417, %v481
    %v483 = vpop.f32.mrb[0].mxu0
    %v484 = vpop.f32.mrb[0].mxu0
    %v485 = vpop.f32.mrb[0].mxu0
    %486 = vdwg.mxu0
    %v487 = vmax.f32 %v482, 0.0
    %v488 = vpack.c.bf16 %v487, %v487
    %v489 = vld [vmem:[%s7] sm:$0xf]
    %v490 = vld [vmem:[%s7 + $0x4] sm:$0xf]
    %v491 = vld [vmem:[%s7 + $0x8] sm:$0xf]
    %v492 = vld [vmem:[%s7 + $0xc] sm:$0xf]
    %v493 = vld [vmem:[#allocation2] sm:$0x1]
    %v495 = vlaneseq
    %v496 = vshrl.u32 %v495, 7
    %v497 = vsub.s32 0, %v496
    %v498 = vrot.slane %v493, %v497
    %v504 = vunpack.c.l.b16 %v489
    %v505 = vunpack.c.l.b16 %v490
    %v506 = vunpack.c.l.b16 %v491
    %v507 = vunpack.c.l.b16 %v492
    %v508 = vpack.c.b16 %v505, %v504
    %v509 = vpack.c.b16 %v507, %v506
    %vm512 = vcmask 261120
    %v514 = vsel %vm512, %v488, 0
    %516 = vmatprep.subr.bf16.mxu0 0
    %517 = vmatpush1.bf16.msra.mxu0 %v508
    %518 = vmatprep.subr.bf16.mxu0 0
    %519 = vmatpush1.bf16.msra.mxu0 %v509
    %520 = vmatprep.subr.bf16.mxu0 0
    %521 = vmatpush1.bf16.msra.mxu0 0
    %522 = vmatprep.subr.bf16.mxu0 0
    %523 = vmatpush1.bf16.msra.mxu0 0
    %524 = vmatprep.subr.bf16.mxu0 0
    %525 = vmatpush1.bf16.msra.mxu0 0
    %526 = vmatprep.subr.bf16.mxu0 0
    %527 = vmatpush1.bf16.msra.mxu0 0
    %528 = vmatprep.subr.bf16.mxu0 0
    %529 = vmatpush1.bf16.msra.mxu0 0
    %530 = vmatprep.subr.bf16.mxu0 0
    %531 = vmatpush1.bf16.msra.mxu0 0
    %532 = vmatprep.subr.bf16.mxu0 0
    %533 = vmatpush1.bf16.msra.mxu0 0
    %534 = vmatprep.subr.bf16.mxu0 0
    %535 = vmatpush1.bf16.msra.mxu0 0
    %536 = vmatprep.subr.bf16.mxu0 0
    %537 = vmatpush1.bf16.msra.mxu0 0
    %538 = vmatprep.subr.bf16.mxu0 0
    %539 = vmatpush1.bf16.msra.mxu0 0
    %540 = vmatprep.subr.bf16.mxu0 0
    %541 = vmatpush1.bf16.msra.mxu0 0
    %542 = vmatprep.subr.bf16.mxu0 0
    %543 = vmatpush1.bf16.msra.mxu0 0
    %544 = vmatprep.subr.bf16.mxu0 0
    %545 = vmatpush1.bf16.msra.mxu0 0
    %546 = vmatprep.subr.bf16.mxu0 0
    %547 = vmatpush1.bf16.msra.mxu0 0
    %548 = vmatprep.mubr.bf16.mxu0 0
    %549 = vmatmul.mubr.bf16.gmra.mrb[0].mxu0 %v514
    %v550 = vpop.f32.mrb[0].mxu0
    %v551 = vadd.f32 %v498, %v550
    %v552 = vpop.f32.mrb[0].mxu0
    %v553 = vpop.f32.mrb[0].mxu0
    %v554 = vpop.f32.mrb[0].mxu0
    %555 = vdwg.mxu0
    %vm556 = vcmask 7168
    %557 = vst.msk [vmem:[%s9] sm:$0xff] %vm556, %v551
    // Predicated region
    $region42: #{tpu_custom_call.1} parent=1 // pred_check
      _
    $region43: #{tpu_custom_call.1} parent=1 // pred_check_branch
      %559 = sbr.rel (0) target = $region45
    $region44: #{tpu_custom_call.1} parent=1 // pred_region
      _
    $region45: #{tpu_custom_call.1} parent=1 // pred_fallthru
      _
    // Predicated region
    $region46: #{tpu_custom_call.1} parent=1 // pred_check
      _
    $region47: #{tpu_custom_call.1} parent=1 // pred_check_branch
      %561 = sbr.rel (0) target = $region49
    $region48: #{tpu_custom_call.1} parent=1 // pred_region
      _
    $region49: #{tpu_custom_call.1} parent=1 // pred_fallthru
      _
    %562 = vsyncpa [#allocation4], 1

</llo_original>
